<compile_context>
chip_gen: v5e
topology: v5e:2x2
jax: 0.10.0
libtpu: 0.0.40
codegen_flags: <defaults>
</compile_context>

<pallas_src>
import functools

import jax
import jax.numpy as jnp
from jax.experimental import pallas as pl
from jax.experimental.pallas import tpu as pltpu


def _cdiv(a, b):
    return -(-a // b)


def _round_up(a, b):
    return _cdiv(a, b) * b


def corr2d_kernel(w_ref, b_ref, x_hbm, o_ref, xbuf, sem, *,
                  kh, kw, tile_h, slab_h, tiles_per_core):
    # w_ref : (kh, kw) f32 in SMEM
    # b_ref : (1,)     f32 in SMEM
    # x_hbm : (Hin_pad, W_pad) in HBM (manual DMA)
    # o_ref : (tile_h, W_pad) VMEM output block
    # xbuf  : (2, slab_h, W_pad) VMEM double buffer
    # sem   : DMA semaphores (2,)
    c = pl.program_id(0)                      # "core" (parallel) axis
    i = pl.program_id(1)                      # row-tile axis (sequential)
    tile = c * tiles_per_core + i             # global row-tile index
    w_lanes = o_ref.shape[-1]

    def start_fetch(tile_idx, slot):
        row0 = pl.multiple_of(tile_idx * tile_h, 8)
        pltpu.make_async_copy(
            x_hbm.at[pl.ds(row0, slab_h), :],
            xbuf.at[slot],
            sem.at[slot],
        ).start()

    # Prime the pipeline on each core's first row tile.
    @pl.when(i == 0)
    def _():
        start_fetch(tile, 0)

    slot = i % 2

    # Wait for the slab of the current tile.
    pltpu.make_async_copy(
        x_hbm.at[pl.ds(0, slab_h), :], xbuf.at[slot], sem.at[slot]
    ).wait()

    # Prefetch the next tile's slab into the other buffer (same core).
    if tiles_per_core > 1:
        @pl.when(i + 1 < tiles_per_core)
        def _():
            start_fetch(tile + 1, 1 - slot)

    x = xbuf[slot].astype(jnp.float32)        # (slab_h, W_pad)

    # Hoisted scalar weights; bias folded into the accumulator init.
    w = [[w_ref[di, dj] for dj in range(kw)] for di in range(kh)]
    acc = jnp.full((tile_h, w_lanes), b_ref[0], dtype=jnp.float32)

    for dj in range(kw):
        # Lane shift via XLU roll (jnp.roll semantics): column j of x_dj is
        # column (j + dj) of x.  Wrap-around columns land in the padded /
        # cropped region, so they never reach the final output.  x is 2-D, so
        # the lane axis is 1 (Mosaic roll requires a non-negative axis).
        x_dj = x if dj == 0 else pltpu.roll(x, shift=w_lanes - dj, axis=1)
        for di in range(kh):
            acc = acc + w[di][dj] * x_dj[di:di + tile_h, :]

    o_ref[...] = acc


def conv2d_forward(x, weight, bias, *, tile_h=None, n_split=2):
    """Equivalent of Conv2D.forward: corr2d(x, weight) + bias."""
    H, W = x.shape
    kh, kw = weight.shape
    Ho, Wo = H - kh + 1, W - kw + 1

    # Lane-dense width.
    W_pad = _round_up(max(W, 1), 128)

    # Row tile: biggest multiple of 8 that keeps ~4 tile-sized buffers
    # (2 double-buffered input slabs + 2 output buffers) under ~32 MiB.
    if tile_h is None:
        vmem_budget = 32 * 1024 * 1024
        bytes_per_row = 4 * W_pad * jnp.dtype(x.dtype).itemsize
        cap = max(8, (vmem_budget // bytes_per_row) // 8 * 8)
        tile_h = int(min(512, cap, _round_up(_cdiv(Ho, n_split), 8)))
    tile_h = max(8, _round_up(tile_h, 8))

    tiles_per_core = _cdiv(Ho, tile_h * n_split)
    tiles_total = n_split * tiles_per_core
    Ho_pad = tiles_total * tile_h
    slab_h = _round_up(tile_h + kh - 1, 8)          # halo slab, 8-row aligned
    Hin_pad = (tiles_total - 1) * tile_h + slab_h   # >= H

    x_p = jnp.pad(x.astype(jnp.float32), ((0, Hin_pad - H), (0, W_pad - W)))
    weight = weight.astype(jnp.float32)
    bias = bias.astype(jnp.float32)

    kernel = functools.partial(
        corr2d_kernel, kh=kh, kw=kw, tile_h=tile_h, slab_h=slab_h,
        tiles_per_core=tiles_per_core)

    out_p = pl.pallas_call(
        kernel,
        out_shape=jax.ShapeDtypeStruct((Ho_pad, W_pad), jnp.float32),
        grid_spec=pltpu.PrefetchScalarGridSpec(
            num_scalar_prefetch=0,
            grid=(n_split, tiles_per_core),
            in_specs=[
                pl.BlockSpec(memory_space=pltpu.SMEM),   # weight scalars
                pl.BlockSpec(memory_space=pltpu.SMEM),   # bias scalar
                pl.BlockSpec(memory_space=pl.ANY),       # x stays in HBM
            ],
            out_specs=pl.BlockSpec(
                (tile_h, W_pad),
                lambda c, i: (c * tiles_per_core + i, 0)),
            scratch_shapes=[
                pltpu.VMEM((2, slab_h, W_pad), jnp.float32),  # double-buffered slab
                pltpu.SemaphoreType.DMA((2,)),
            ],
        ),
        compiler_params=pltpu.CompilerParams(
            dimension_semantics=("parallel", "arbitrary"),
            vmem_limit_bytes=48 * 1024 * 1024,
        ),
    )(weight, bias, x_p)

    return out_p[:Ho, :Wo]


def reference_conv2d(x, k, b):
    """Pure-JAX reference matching the PyTorch corr2d loop semantics."""
    kh, kw = k.shape
    Ho, Wo = x.shape[0] - kh + 1, x.shape[1] - kw + 1
    out = jnp.zeros((Ho, Wo), jnp.float32)
    for di in range(kh):
        for dj in range(kw):
            out = out + k[di, dj] * x[di:di + Ho, dj:dj + Wo]
    return out + b[0]


if __name__ == "__main__":
    # 1) Exact values from the module's spec example (X 3x3, K=[[0,1],[2,3]]).
    X = jnp.array([[0., 1., 2.], [3., 4., 5.], [6., 7., 8.]], jnp.float32)
    K = jnp.array([[0., 1.], [2., 3.]], jnp.float32)
    b0 = jnp.zeros((1,), jnp.float32)
    y = jax.block_until_ready(conv2d_forward(X, K, b0))
    assert y.shape == (2, 2)
    assert jnp.allclose(y, jnp.array([[19., 25.], [37., 43.]]), atol=1e-5)

    # 2) Module-style usage: 16x16 input, (2,2) kernel (torch.rand init), zero bias.
    key = jax.random.PRNGKey(0)
    k_x, k_w, k_x2 = jax.random.split(key, 3)
    x = jax.random.normal(k_x, (16, 16), dtype=jnp.float32)
    weight = jax.random.uniform(k_w, (2, 2), dtype=jnp.float32)
    bias = jnp.zeros((1,), dtype=jnp.float32)
    out = jax.block_until_ready(conv2d_forward(x, weight, bias))
    ref = reference_conv2d(x, weight, bias)
    assert out.shape == (15, 15)
    assert jnp.allclose(out, ref, atol=1e-5, rtol=1e-5)

    # 3) Exercise the multi-tile, double-buffered DMA path (small forced tile,
    #    3x3 kernel, non-zero bias).
    x3 = jax.random.normal(k_x2, (64, 32), dtype=jnp.float32)
    w3 = jax.random.uniform(k_w, (3, 3), dtype=jnp.float32)
    b3 = jnp.array([0.25], dtype=jnp.float32)
    out3 = jax.block_until_ready(conv2d_forward(x3, w3, b3, tile_h=8))
    ref3 = reference_conv2d(x3, w3, b3)
    assert out3.shape == (62, 30)
    assert jnp.allclose(out3, ref3, atol=1e-4, rtol=1e-4)

    print("KERNEL_OK")
</pallas_src>

<mosaic_0001>
module attributes {stable_mosaic.version = 11 : i64} {
  func.func @corr2d_kernel(%arg0: i32, %arg1: i32, %arg2: memref<2x2xf32, #tpu.memory_space<smem>>, %arg3: memref<1xf32, #tpu.memory_space<smem>>, %arg4: memref<24x128xf32, #tpu.memory_space<any>>, %arg5: memref<8x128xf32, #tpu.memory_space<vmem>>, %arg6: memref<2x16x128xf32, #tpu.memory_space<vmem>>, %arg7: memref<2x!tpu.dma_semaphore, #tpu.memory_space<semaphore_mem>>) attributes {dimension_semantics = [#tpu.dimension_semantics<parallel>, #tpu.dimension_semantics<arbitrary>], iteration_bounds = array<i64: 2, 1>, scalar_prefetch = 0 : i64, scratch_operands = 2 : i64, tpu.core_type = #tpu.core_type<tc>, window_params = [{transform_indices = @transform_0, window_bounds = array<i64: 2, 2>}, {transform_indices = @transform_1, window_bounds = array<i64: 1>}, {}, {transform_indices = @transform_3, window_bounds = array<i64: 8, 128>}]} {
    %c1_i32 = arith.constant 1 : i32
    %0 = arith.muli %arg0, %c1_i32 : i32
    %1 = arith.addi %0, %arg1 : i32
    %c0_i32 = arith.constant 0 : i32
    %2 = arith.cmpi eq, %arg1, %c0_i32 : i32
    %3 = arith.extui %2 : i1 to i32
    %c0_i32_0 = arith.constant 0 : i32
    %4 = arith.cmpi ne, %3, %c0_i32_0 : i32
    scf.if %4 {
      %c8_i32 = arith.constant 8 : i32
      %47 = arith.muli %1, %c8_i32 : i32
      %48 = tpu.assume_multiple %47, 8 : i32
      %c0_i32_21 = arith.constant 0 : i32
      %c0_i32_22 = arith.constant 0 : i32
      %c0_i32_23 = arith.constant 0 : i32
      %49 = tpu.memref_slice %arg4[%48, %c0_i32_23] : memref<24x128xf32, #tpu.memory_space<any>> -> memref<16x128xf32, #tpu.memory_space<any>>
      %c0_i32_24 = arith.constant 0 : i32
      %c0_i32_25 = arith.constant 0 : i32
      %50 = tpu.memref_slice %arg6[%c0_i32_21, %c0_i32_24, %c0_i32_25] : memref<2x16x128xf32, #tpu.memory_space<vmem>> -> memref<1x16x128xf32, #tpu.memory_space<vmem>>
      %51 = tpu.memref_squeeze %50 : memref<1x16x128xf32, #tpu.memory_space<vmem>> -> memref<16x128xf32, #tpu.memory_space<vmem>>
      %52 = tpu.memref_slice %arg7[%c0_i32_22] : memref<2x!tpu.dma_semaphore, #tpu.memory_space<semaphore_mem>> -> memref<1x!tpu.dma_semaphore, #tpu.memory_space<semaphore_mem>>
      %53 = tpu.memref_squeeze %52 : memref<1x!tpu.dma_semaphore, #tpu.memory_space<semaphore_mem>> -> memref<!tpu.dma_semaphore, #tpu.memory_space<semaphore_mem>>
      tpu.enqueue_dma source(%49 : memref<16x128xf32, #tpu.memory_space<any>>) target(%51 : memref<16x128xf32, #tpu.memory_space<vmem>>) target_semaphore(%53 : memref<!tpu.dma_semaphore, #tpu.memory_space<semaphore_mem>>)
    } else {
    }
    %c2_i32 = arith.constant 2 : i32
    %c0_i32_1 = arith.constant 0 : i32
    %5 = arith.cmpi eq, %c2_i32, %c0_i32_1 : i32
    %c1_i32_2 = arith.constant 1 : i32
    %6 = arith.select %5, %c1_i32_2, %c2_i32 : i32
    %7 = arith.remsi %arg1, %6 : i32
    %c0_i32_3 = arith.constant 0 : i32
    %8 = arith.cmpi ne, %7, %c0_i32_3 : i32
    %c0_i32_4 = arith.constant 0 : i32
    %9 = arith.cmpi slt, %7, %c0_i32_4 : i32
    %c0_i32_5 = arith.constant 0 : i32
    %10 = arith.cmpi slt, %6, %c0_i32_5 : i32
    %11 = arith.xori %9, %10 : i1
    %12 = arith.andi %11, %8 : i1
    %13 = arith.addi %7, %6 : i32
    %14 = arith.select %12, %13, %7 : i32
    %c0_i32_6 = arith.constant 0 : i32
    %c0_i32_7 = arith.constant 0 : i32
    %15 = tpu.memref_slice %arg4[%c0_i32_6, %c0_i32_7] : memref<24x128xf32, #tpu.memory_space<any>> -> memref<16x128xf32, #tpu.memory_space<any>>
    %c0_i32_8 = arith.constant 0 : i32
    %c0_i32_9 = arith.constant 0 : i32
    %16 = tpu.memref_slice %arg6[%14, %c0_i32_8, %c0_i32_9] : memref<2x16x128xf32, #tpu.memory_space<vmem>> -> memref<1x16x128xf32, #tpu.memory_space<vmem>>
    %17 = tpu.memref_squeeze %16 : memref<1x16x128xf32, #tpu.memory_space<vmem>> -> memref<16x128xf32, #tpu.memory_space<vmem>>
    %18 = tpu.memref_slice %arg7[%14] : memref<2x!tpu.dma_semaphore, #tpu.memory_space<semaphore_mem>> -> memref<1x!tpu.dma_semaphore, #tpu.memory_space<semaphore_mem>>
    %19 = tpu.memref_squeeze %18 : memref<1x!tpu.dma_semaphore, #tpu.memory_space<semaphore_mem>> -> memref<!tpu.dma_semaphore, #tpu.memory_space<semaphore_mem>>
    tpu.wait_dma2 semaphore(%19 : memref<!tpu.dma_semaphore, #tpu.memory_space<semaphore_mem>>) src(%15 : memref<16x128xf32, #tpu.memory_space<any>>) dst(%17 : memref<16x128xf32, #tpu.memory_space<vmem>>)
    %20 = arith.index_cast %14 : i32 to index
    %c0 = arith.constant 0 : index
    %c0_10 = arith.constant 0 : index
    %21 = vector.load %arg6[%20, %c0, %c0_10] : memref<2x16x128xf32, #tpu.memory_space<vmem>>, vector<1x16x128xf32>
    %22 = vector.shape_cast %21 : vector<1x16x128xf32> to vector<16x128xf32>
    %c0_11 = arith.constant 0 : index
    %c0_12 = arith.constant 0 : index
    %23 = memref.load %arg2[%c0_11, %c0_12] : memref<2x2xf32, #tpu.memory_space<smem>>
    %c0_13 = arith.constant 0 : index
    %c1 = arith.constant 1 : index
    %24 = memref.load %arg2[%c0_13, %c1] : memref<2x2xf32, #tpu.memory_space<smem>>
    %c1_14 = arith.constant 1 : index
    %c0_15 = arith.constant 0 : index
    %25 = memref.load %arg2[%c1_14, %c0_15] : memref<2x2xf32, #tpu.memory_space<smem>>
    %c1_16 = arith.constant 1 : index
    %c1_17 = arith.constant 1 : index
    %26 = memref.load %arg2[%c1_16, %c1_17] : memref<2x2xf32, #tpu.memory_space<smem>>
    %c0_18 = arith.constant 0 : index
    %27 = memref.load %arg3[%c0_18] : memref<1xf32, #tpu.memory_space<smem>>
    %28 = vector.broadcast %27 : f32 to vector<8x128xf32>
    %29 = vector.extract_strided_slice %22 {offsets = [0, 0], sizes = [8, 128], strides = [1, 1]} : vector<16x128xf32> to vector<8x128xf32>
    %30 = vector.broadcast %23 : f32 to vector<8x128xf32>
    %31 = arith.mulf %30, %29 : vector<8x128xf32>
    %32 = arith.addf %28, %31 : vector<8x128xf32>
    %33 = vector.extract_strided_slice %22 {offsets = [1, 0], sizes = [8, 128], strides = [1, 1]} : vector<16x128xf32> to vector<8x128xf32>
    %34 = vector.broadcast %25 : f32 to vector<8x128xf32>
    %35 = arith.mulf %34, %33 : vector<8x128xf32>
    %36 = arith.addf %32, %35 : vector<8x128xf32>
    %c127_i32 = arith.constant 127 : i32
    %37 = tpu.dynamic_rotate %22 by %c127_i32 dim 1 : vector<16x128xf32>, i32 -> vector<16x128xf32>
    %38 = vector.extract_strided_slice %37 {offsets = [0, 0], sizes = [8, 128], strides = [1, 1]} : vector<16x128xf32> to vector<8x128xf32>
    %39 = vector.broadcast %24 : f32 to vector<8x128xf32>
    %40 = arith.mulf %39, %38 : vector<8x128xf32>
    %41 = arith.addf %36, %40 : vector<8x128xf32>
    %42 = vector.extract_strided_slice %37 {offsets = [1, 0], sizes = [8, 128], strides = [1, 1]} : vector<16x128xf32> to vector<8x128xf32>
    %43 = vector.broadcast %26 : f32 to vector<8x128xf32>
    %44 = arith.mulf %43, %42 : vector<8x128xf32>
    %45 = arith.addf %41, %44 : vector<8x128xf32>
    %c0_19 = arith.constant 0 : index
    %c0_20 = arith.constant 0 : index
    %46 = vector.load %arg5[%c0_19, %c0_20] : memref<8x128xf32, #tpu.memory_space<vmem>>, vector<8x128xf32>
    tpu.vector_store %arg5[%c0_19, %c0_20], %45 {strides = array<i32>} : memref<8x128xf32, #tpu.memory_space<vmem>>, vector<8x128xf32>,
    return
  }
  func.func @transform_0(%arg0: i32, %arg1: i32) -> (i32, i32) {
    %c0_i32 = arith.constant 0 : i32
    %c0_i32_0 = arith.constant 0 : i32
    %c0_i32_1 = arith.constant 0 : i32
    return %c0_i32, %c0_i32_0 : i32, i32
  }
  func.func @transform_1(%arg0: i32, %arg1: i32) -> i32 {
    %c0_i32 = arith.constant 0 : i32
    %c0_i32_0 = arith.constant 0 : i32
    return %c0_i32 : i32
  }
  func.func @transform_3(%arg0: i32, %arg1: i32) -> (i32, i32) {
    %c1_i32 = arith.constant 1 : i32
    %0 = arith.muli %arg0, %c1_i32 : i32
    %1 = arith.addi %0, %arg1 : i32
    %c0_i32 = arith.constant 0 : i32
    %c0_i32_0 = arith.constant 0 : i32
    return %1, %c0_i32 : i32, i32
  }
}

</mosaic_0001>

<llo_original>
// kernel: tpu_custom_call.1
$region0: #{tpu_custom_call.1}
  #allocation0 [shape = 'u32[]', space=smem, size = 0x4, offset = 0x4, fixed_abs, tag = 'smem constant byte address 0x4 - core index']
  #allocation1 [shape = 'u32[72,128]{1,0:T(1,128)}', space=vmem, size = 0x9000, scoped, tag = 'internal scratch']
  #allocation2 [shape = 'f32[2,16,128]{2,1,0:T(8,128)}', space=vmem, size = 0x4000, scoped, tag = 'scratch operand']
  #allocation3 [shape = 's32[2]{0}', space=sflag, size = 0x8, scoped, tag = 'scratch operand']
  #allocation4 [shape = 'f32[1]{0:T(128)S(6)}', space=smem, size = 0x200, scoped, tag = 'scoped memory for tpu_custom_call.1']
  #allocation9 [shape = 's32[]', space=sflag, size = 0x4, offset = 0, fixed_abs, tag = 'sflag constant byte address 0x0 - dummy sync flag']
  #allocation10 [shape = 's32[]', space=sflag, size = 0x4, offset = 0, fixed_abs, tag = 'sflag constant byte address 0x0 - dummy sync flag']
  #allocation11 [shape = 'u32[]', space=smem, size = 0x4, offset = 0x44, fixed_abs, tag = 'smem constant byte address 0x44 - assertion arg 0']
  #allocation12 [shape = 'u32[]', space=smem, size = 0x4, offset = 0x48, fixed_abs, tag = 'smem constant byte address 0x48 - assertion arg 1']
  %s0 = inlined_call_operand.vmem [shape: f32[2,2], index: 0, kind: input, shape index: {}]
  %s1 = inlined_call_operand.<no memory space> [shape: f32[1], index: 1, kind: input, shape index: {}]
  %s2 = inlined_call_operand.hbm [shape: f32[24,128], index: 2, kind: input, shape index: {}]
  %s3 = inlined_call_operand.hbm [shape: f32[16,128], index: 3, kind: output, shape index: {}]
  %s4 = sld [smem:[#allocation0]]
  $region53: #{tpu_custom_call.1} parent=0
    _
  %s6 = ssub.s32 1, %s4
  %s7 = scalar_select 0, %s6, %s4
  %8 = sst [smem:[#allocation4]] %s1
  $region1: #{tpu_custom_call.1} parent=0
    #allocation5 [shape = 'u8[1024]{0}', space=smem, size = 0x400, scoped, tag = 'input window, operand 0, single buffered']
    #allocation6 [shape = 's32[2]{0}', space=sflag, size = 0x8, scoped, tag = 'scoped memory for tpu_custom_call.1']
    #allocation7 [shape = 's32[2]{0}', space=sflag, size = 0x8, scoped, tag = 'scoped memory for tpu_custom_call.1']
    #allocation8 [shape = 'u8[8192]{0}', space=vmem, size = 0x2000, scoped, tag = 'output window, operand 0']
    %9 = vsyncpa [#allocation7], 0
    %10 = vsyncpa [#allocation6], 0
    %s11 = scalar_lea.sflag [#allocation6], 1
    %12 = vsyncpa %s11, 0
    loop: start=0, step=1, limit=4
    $region2: #{tpu_custom_call.1} parent=1 // loop_pre_header
      _
    $region3: #{tpu_custom_call.1} parent=1 // loop_header
      %s14 = sphi 0, %s18
      %p15 = scmp.ge.s32.totalorder %s14, 4
      %s21 = sphi 0, %s33
      %s22 = sphi 0, %s29
      %s23 = sphi 0, %s21
      %s24 = sphi 0, %s22
      %s25 = sphi 0, %s23
      %s26 = sphi 0, %s24
      %s34 = sphi 0, %s34
      %s36 = sphi 0, %s34
      %s37 = sphi 0, %s36
      %s51 = sphi 0, %s37
      %s55 = sphi 0, %s55
      %s57 = sphi 0, %s55
      %s58 = sphi 0, %s57
      %s72 = sphi 0, %s58
      %s80 = sphi 0, %s82
      %s83 = sphi 0, %s80
      %s84 = sphi 0, %s83
      %s100 = sphi 0, %s84
    $region4: #{tpu_custom_call.1} parent=1 // loop_header_branch
      %17 = sbr.rel (%p15) target = $region8
    $region5: #{tpu_custom_call.1} parent=1 // loop_body
      %s19 = ssub.s32 %s14, 1
      %s20 = ssub.s32 %s14, 2
      %s27 = sadd.s32 1, %s22
      %p28 = scmp.ge.s32.totalorder %s27, 1
      %s29 = scalar_select %p28, 0, %s27
      %s30 = sadd.s32 1, %s21
      %s31 = scalar_select %p28, %s30, %s21
      %p32 = scmp.ge.s32.totalorder %s31, 2
      %s33 = scalar_select %p32, 0, %s31
      %s35 = sadd.s32 %s34, 1
      %p38 = scmp.eq.s32.totalorder %s14, 1
      %p39 = scmp.ne.s32.totalorder %s34, %s36
      %p40 = scmp.eq.s32.totalorder %s14, 0
      %p41 = por %p39, %p40
      %p42 = scmp.ne.s32.totalorder %s34, %s36
      %p43 = scmp.eq.s32.totalorder %s19, 1
      %p44 = por %p42, %p43
      %p45 = scmp.ne.s32.totalorder %s36, %s37
      %p46 = scmp.eq.s32.totalorder %s19, 0
      %p47 = por %p45, %p46
      %p48 = scmp.ne.s32.totalorder %s36, %s37
      %p49 = scmp.eq.s32.totalorder %s20, 1
      %p50 = por %p48, %p49
      %p52 = scmp.ne.s32.totalorder %s37, %s51
      %p53 = scmp.eq.s32.totalorder %s20, 0
      %p54 = por %p52, %p53
      %s56 = sadd.s32 %s55, 1
      %p59 = scmp.eq.s32.totalorder %s14, 1
      %p60 = scmp.ne.s32.totalorder %s55, %s57
      %p61 = scmp.eq.s32.totalorder %s14, 0
      %p62 = por %p60, %p61
      %p63 = scmp.ne.s32.totalorder %s55, %s57
      %p64 = scmp.eq.s32.totalorder %s19, 1
      %p65 = por %p63, %p64
      %p66 = scmp.ne.s32.totalorder %s57, %s58
      %p67 = scmp.eq.s32.totalorder %s19, 0
      %p68 = por %p66, %p67
      %p69 = scmp.ne.s32.totalorder %s57, %s58
      %p70 = scmp.eq.s32.totalorder %s20, 1
      %p71 = por %p69, %p70
      %p73 = scmp.ne.s32.totalorder %s58, %s72
      %p74 = scmp.eq.s32.totalorder %s20, 0
      %p75 = por %p73, %p74
      %s76 = sadd.s32 %s21, %s22
      %s77 = sadd.s32 %s33, %s29
      %s78 = ssub.s32 %s76, %s77
      %p79 = scmp.eq.s32.totalorder %s78, 0
      %s81 = sadd.s32 %s80, 1
      %s82 = scalar_select %p79, %s80, %s81
      %p85 = pneg %p79
      %p86 = scmp.eq.s32.totalorder %s14, 1
      %p87 = por %p85, %p86
      %p88 = scmp.ne.s32.totalorder %s80, %s83
      %p89 = scmp.eq.s32.totalorder %s14, 0
      %p90 = por %p88, %p89
      %p91 = scmp.ne.s32.totalorder %s80, %s83
      %p92 = scmp.eq.s32.totalorder %s19, 1
      %p93 = por %p91, %p92
      %p94 = scmp.ne.s32.totalorder %s83, %s84
      %p95 = scmp.eq.s32.totalorder %s19, 0
      %p96 = por %p94, %p95
      %p97 = scmp.ne.s32.totalorder %s83, %s84
      %p98 = scmp.eq.s32.totalorder %s20, 1
      %p99 = por %p97, %p98
      %p101 = scmp.ne.s32.totalorder %s84, %s100
      %p102 = scmp.eq.s32.totalorder %s20, 0
      %p103 = por %p101, %p102
      %p104 = scmp.le.s32.totalorder 1, %s14
      %p105 = scmp.lt.s32.totalorder %s14, 3
      %p106 = pnand %p104, %p105
      %p107 = pneg %p106
      // Predicated region
      $region9: #{tpu_custom_call.1} parent=5 // pred_check
        _
      $region10: #{tpu_custom_call.1} parent=5 // pred_check_branch
        %109 = sbr.rel (%p106) target = $region12
      $region11: #{tpu_custom_call.1} parent=5 // pred_region
        %s110 = ssub.s32 %s14, 1
        // Predicated region
        $region13: #{tpu_custom_call.1} parent=11 // pred_check
          %p111 = pneg %p47
        $region14: #{tpu_custom_call.1} parent=11 // pred_check_branch
          %113 = sbr.rel (%p111) target = $region16
        $region15: #{tpu_custom_call.1} parent=11 // pred_region
          %115 = vsyncadd [#allocation7], 0
          %s117 = sshll.u32 %s0, 4
          %s118 = int_to_ptr.vmem [resolvable:$true] %s117
          %120 = dma.vmem_to_smem %s118, 32, [#allocation5], [#allocation7]
        $region16: #{tpu_custom_call.1} parent=11 // pred_fallthru
          _
        // Predicated region
        $region17: #{tpu_custom_call.1} parent=11 // pred_check
          %p121 = pneg %p68
        $region18: #{tpu_custom_call.1} parent=11 // pred_check_branch
          %123 = sbr.rel (%p121) target = $region20
        $region19: #{tpu_custom_call.1} parent=11 // pred_region
          _
        $region20: #{tpu_custom_call.1} parent=11 // pred_fallthru
          _
      $region12: #{tpu_custom_call.1} parent=5 // pred_fallthru
        _
      %p124 = scmp.lt.s32.totalorder %s14, 2
      // Predicated region
      $region21: #{tpu_custom_call.1} parent=5 // pred_check
        %p125 = pneg %p124
      $region22: #{tpu_custom_call.1} parent=5 // pred_check_branch
        %127 = sbr.rel (%p125) target = $region24
      $region23: #{tpu_custom_call.1} parent=5 // pred_region
        _
      $region24: #{tpu_custom_call.1} parent=5 // pred_fallthru
        _
      %p128 = scmp.le.s32.totalorder 1, %s14
      %p129 = scmp.lt.s32.totalorder %s14, 3
      %p130 = pnand %p128, %p129
      %p131 = pneg %p130
      // Predicated region
      $region25: #{tpu_custom_call.1} parent=5 // pred_check
        _
      $region26: #{tpu_custom_call.1} parent=5 // pred_check_branch
        %133 = sbr.rel (%p130) target = $region28
      $region27: #{tpu_custom_call.1} parent=5 // pred_region
        %s134 = ssub.s32 %s14, 1
        // Predicated region
        $region29: #{tpu_custom_call.1} parent=27 // pred_check
          %p135 = pneg %p47
        $region30: #{tpu_custom_call.1} parent=27 // pred_check_branch
          %137 = sbr.rel (%p135) target = $region32
        $region31: #{tpu_custom_call.1} parent=27 // pred_region
          %139 = dma.done [#allocation7], 32
        $region32: #{tpu_custom_call.1} parent=27 // pred_fallthru
          _
        %140 = sfence
        %p141 = pneg %p47
        %p142 = pneg %p44
        %p143 = pneg %p68
        %p144 = pneg %p65
        %p145 = pneg %p96
        %p146 = pneg %p93
        %s147 = sand.u32 %s83, 1
        %s148 = scalar_lea.sflag [#allocation6], %s147
        %s149 = sand.u32 %s83, 1
        %s150 = smul.addr %s149, 8
        %s151 = scalar_lea.vmem [#allocation8], %s150
        %s152 = sadd.s32 %s23, %s24
        %s153 = sadd.s32 %s23, %s24
        %p154 = scmp.eq.s32.totalorder %s24, 0
        // Predicated region
        $region33: #{tpu_custom_call.1} parent=27 // pred_check
          %p155 = pneg %p154
        $region34: #{tpu_custom_call.1} parent=27 // pred_check_branch
          %157 = sbr.rel (%p155) target = $region36
        $region35: #{tpu_custom_call.1} parent=27 // pred_region
          %s158 = smul.u32 %s153, 8
          %s159 = scalar_lea.hbm %s2, %s158
          // Predicated region
          $region37: #{tpu_custom_call.1} parent=35 // pred_check
            _
          $region38: #{tpu_custom_call.1} parent=35 // pred_check_branch
            %161 = sbr.rel target = $region40
          $region39: #{tpu_custom_call.1} parent=35 // pred_region
            %162 = sst [smem:[#allocation11]] [#allocation10]
            %163 = sst [smem:[#allocation12]] [#allocation9]
          $region40: #{tpu_custom_call.1} parent=35 // pred_fallthru
            _
          %165 = shalt.err (0)
          %s167 = sshll.u32 %s159, 4
          %s168 = int_to_ptr.hbm [resolvable:$true] %s167
          %s169 = sshll.u32 [#allocation2], 4
          %s170 = int_to_ptr.vmem [resolvable:$true] %s169
          %172 = dma.hbm_to_vmem [thread:$0]  %s168, 256, %s170, [#allocation3]
        $region36: #{tpu_custom_call.1} parent=27 // pred_fallthru
          _
        %p173 = scmp.lt.s32.totalorder %s24, 0
        %s174 = ssub.s32 0, %s24
        %s175 = scalar_select %p173, %s174, %s24
        %s176 = sand.u32 %s175, 1
        %s177 = ssub.s32 0, %s176
        %s178 = scalar_select %p173, %s177, %s176
        %p179 = scmp.ne.s32.totalorder %s178, 0
        %p180 = scmp.lt.s32.totalorder %s178, 0
        %p181 = pnand %p180, %p179
        %p182 = pneg %p181
        %s183 = sadd.s32 %s178, 2
        %s184 = scalar_select %p182, %s183, %s178
        %s185 = smul.u32 %s184, 16
        %s186 = scalar_lea.vmem [#allocation2], %s185
        %s187 = scalar_lea.sflag [#allocation3], %s184
        %s188 = smul.u32 16, 1
        %s189 = sshll.u32 %s188, 4
        %190 = dma.done %s187, %s189
        %v191 = vld [vmem:[%s186] sm:$0xff]
        %v192 = vld [vmem:[%s186 + $0x8] sm:$0xff]
        %s193 = sld [smem:[#allocation5]]
        %s194 = sld [smem:[#allocation5 + $0x1]]
        %s195 = sld [smem:[#allocation5 + $0x80]]
        %s196 = sld [smem:[#allocation5 + $0x81]]
        %s197 = sld [smem:[#allocation4]]
        %v198 = vstv %s197
        %v199 = vstv %s193
        %v200 = vmul.f32 %v199, %v191
        %v201 = vadd.f32 %v198, %v200
        %v202 = vstv %s195
        %v203 = vmul.f32 %v202, %v191
        %v204 = vmul.f32 %v202, %v192
        %vm207 = vcmask 1046528
        %v208 = vrot.slane %v203, 1
        %v209 = vrot.slane %v204, 1
        %v210 = vsel %vm207, %v208, %v209
        %v212 = vadd.f32 %v201, %v210
        %213 = vrot.lane.b32.xlu0 %v191, 127
        %v214 = vpop.permute.xlu0 %213
        %215 = vrot.lane.b32.xlu0 %v192, 127
        %v216 = vpop.permute.xlu0 %215
        %v217 = vstv %s194
        %v218 = vmul.f32 %v217, %v214
        %v219 = vadd.f32 %v212, %v218
        %v220 = vstv %s196
        %v221 = vmul.f32 %v220, %v214
        %v222 = vmul.f32 %v220, %v216
        %v225 = vrot.slane %v221, 1
        %v226 = vrot.slane %v222, 1
        %v227 = vsel %vm207, %v225, %v226
        %v229 = vadd.f32 %v219, %v227
        %230 = vst [vmem:[%s151] sm:$0xff] %v229
        %s231 = sand.u32 %s83, 1
        %s232 = scalar_lea.sflag [#allocation6], %s231
        %s233 = sand.u32 %s83, 1
        %s234 = smul.addr %s233, 8
        %s235 = scalar_lea.vmem [#allocation8], %s234
        // Predicated region
        $region41: #{tpu_custom_call.1} parent=27 // pred_check
          %p236 = pneg %p93
        $region42: #{tpu_custom_call.1} parent=27 // pred_check_branch
          %238 = sbr.rel (%p236) target = $region44
        $region43: #{tpu_custom_call.1} parent=27 // pred_region
          %s239 = sadd.s32 %s23, %s24
          %241 = vsyncadd %s232, 0
          %s242 = smul.addr %s239, 8
          %s243 = scalar_lea.hbm %s3, %s242
          %s245 = sshll.u32 %s235, 4
          %s246 = int_to_ptr.vmem [resolvable:$true] %s245
          %s247 = sshll.u32 %s243, 4
          %s248 = int_to_ptr.hbm [resolvable:$true] %s247
          %250 = dma.vmem_to_hbm [thread:$0]  %s246, 128, %s248, %s232
        $region44: #{tpu_custom_call.1} parent=27 // pred_fallthru
          _
      $region28: #{tpu_custom_call.1} parent=5 // pred_fallthru
        _
      %p251 = scmp.le.s32.totalorder 2, %s14
      // Predicated region
      $region45: #{tpu_custom_call.1} parent=5 // pred_check
        %p252 = pneg %p251
      $region46: #{tpu_custom_call.1} parent=5 // pred_check_branch
        %254 = sbr.rel (%p252) target = $region48
      $region47: #{tpu_custom_call.1} parent=5 // pred_region
        %s255 = ssub.s32 %s14, 2
        // Predicated region
        $region49: #{tpu_custom_call.1} parent=47 // pred_check
          %p256 = pneg %p99
        $region50: #{tpu_custom_call.1} parent=47 // pred_check_branch
          %258 = sbr.rel (%p256) target = $region52
        $region51: #{tpu_custom_call.1} parent=47 // pred_region
          %s259 = sand.u32 %s84, 1
          %s260 = scalar_lea.sflag [#allocation6], %s259
          %s261 = sand.u32 %s84, 1
          %s262 = smul.addr %s261, 8
          %s263 = scalar_lea.vmem [#allocation8], %s262
          %265 = dma.done %s260, 128
        $region52: #{tpu_custom_call.1} parent=47 // pred_fallthru
          _
      $region48: #{tpu_custom_call.1} parent=5 // pred_fallthru
        _
    $region6: #{tpu_custom_call.1} parent=1 // loop_footer
      %s18 = sadd.s32 1, %s14
    $region7: #{tpu_custom_call.1} parent=1 // loop_footer_branch
      %13 = sbr.rel target = $region3
    $region8: #{tpu_custom_call.1} parent=1 // loop_exit
      _
    %266 = vsyncpa [#allocation6], 1
    %s267 = scalar_lea.sflag [#allocation6], 1
    %268 = vsyncpa %s267, 1
    %269 = vsyncpa [#allocation7], 1
    %s270 = scalar_lea.sflag [#allocation7], 1
    %271 = vsyncpa %s270, 1
  %272 = vsyncmov [#allocation3]
  %s273 = vpop.sfrf %272
  %p274 = scmp.eq.s32.totalorder %s273, 0
  %p275 = pneg %p274
  %277 = shalt.err (%p275)
  %s278 = scalar_lea.sflag [#allocation3], 1
  %279 = vsyncmov %s278
  %s280 = vpop.sfrf %279
  %p281 = scmp.eq.s32.totalorder %s280, 0
  %p282 = pneg %p281
  %284 = shalt.err (%p282)

</llo_original>
